<compile_context>
chip_gen: v6e
topology: v6e:2x2x1
jax: 0.10.0
libtpu: 0.0.40
codegen_flags: <defaults>
</compile_context>

<pallas_src>
import jax
import jax.numpy as jnp
from jax.experimental import pallas as pl
from jax.experimental.pallas import tpu as pltpu

EPS = 1e-6

_LANE = 128
_MAX_TD = 8192                 # lane-tile width cap
_MIN_TILES = 8                 # target grid steps for pipelining / megacore
_STEP_X_BYTES = 512 * 1024     # per-step x-tile floor (amortize ~0.35us/step)
_FOOTPRINT_MULT = 6            # x(2-buf) + u(2-buf) + ~2 elementwise temps


def _round_down_lane(v):
    return max(_LANE, (v // _LANE) * _LANE)


def _round_up_lane(v):
    return max(_LANE, ((v + _LANE - 1) // _LANE) * _LANE)


def _vmem_limits():
    """Generation-aware (physical VMEM) scoped limit and per-step tile budget."""
    phys = 64 * 1024 * 1024  # conservative fallback (v7x per-core VMEM)
    try:
        info = pltpu.get_tpu_info()
        phys = int(getattr(info, "vmem_capacity_bytes", phys)) or phys
    except Exception:
        pass
    # 128 MiB parts (v5e/v6e) -> ~96 MiB scoped limit; 64 MiB parts (v7x) -> ~48 MiB.
    vmem_limit = min(int(phys * 0.75), 100 * 1024 * 1024)
    tile_budget = int(vmem_limit * 0.75)
    return vmem_limit, tile_budget


def _choose_tile_d(n, d, tile_budget):
    """Lane-tile width: multiple of 128 (or == D when D < 128), byte-budgeted."""
    if d <= _LANE:
        return d  # single full-width block (block dim == full array dim is legal)
    bytes_per_lane_col = _FOOTPRINT_MULT * n * 4
    td = _round_down_lane(tile_budget // max(bytes_per_lane_col, 1))
    td = min(td, _MAX_TD)
    # Keep >= _MIN_TILES grid steps when D permits, but never shrink a step
    # below ~512 KiB of x (or 4*128 lanes) just to get more steps.
    if d >= _MIN_TILES * _LANE:
        td_tiles = _round_down_lane(d // _MIN_TILES)
        td_step_floor = max(4 * _LANE, _round_up_lane(_STEP_X_BYTES // (4 * n)))
        td = min(td, max(td_tiles, td_step_floor))
    # Never make the block wider than the lane-aligned extent of D.
    td = min(td, _round_down_lane(d))
    return max(_LANE, td)


def _make_batchnorm_kernel(d, td):
    def kernel(x_ref, gamma_ref, beta_ref, u_ref, ld_ref):
        x = x_ref[...]                                   # (N, TD) f32
        gamma = gamma_ref[...]                           # (1, TD) f32
        beta = beta_ref[...]                             # (1, TD) f32

        # Two-pass batch statistics (sublane/XLU reduction; kernel is DMA-bound
        # so the reduction is not on the critical path, and this avoids the
        # one-pass E[x^2]-mu^2 cancellation).
        mu = jnp.mean(x, axis=0, keepdims=True)          # (1, TD)
        diff = x - mu
        var = jnp.mean(diff * diff, axis=0, keepdims=True) + EPS

        inv_std = jax.lax.rsqrt(var)                     # (1, TD)
        scale = inv_std * jnp.exp(gamma)                 # hoisted exp, fused scale
        u_ref[...] = (diff * scale + beta).astype(u_ref.dtype)

        # Per-feature log-det contribution (lane-dense); summed in the wrapper.
        # Note: +EPS appears twice on the log path, matching the PyTorch source.
        ld = gamma - 0.5 * jnp.log(var + EPS)            # (1, TD)
        # Mask lanes beyond D in the ragged last tile so garbage columns (from
        # the partial input block) never reach the wrapper sum.
        col = pl.program_id(0) * td + jax.lax.broadcasted_iota(jnp.int32, (1, td), 1)
        ld_ref[...] = jnp.where(col < d, ld, 0.0)

    return kernel


@jax.jit
def batchnorm_forward(x, gamma, beta):
    """x: (N, D) f32; gamma, beta: (1, D) f32. Returns (log_det (1,), u (N, D))."""
    n, d = x.shape
    vmem_limit, tile_budget = _vmem_limits()
    td = _choose_tile_d(n, d, tile_budget)
    num_tiles = pl.cdiv(d, td)

    u, ld_feat = pl.pallas_call(
        _make_batchnorm_kernel(d, td),
        out_shape=(
            jax.ShapeDtypeStruct((n, d), x.dtype),
            jax.ShapeDtypeStruct((1, d), jnp.float32),
        ),
        grid_spec=pltpu.PrefetchScalarGridSpec(
            num_scalar_prefetch=0,
            grid=(num_tiles,),
            in_specs=[
                pl.BlockSpec((n, td), lambda i: (0, i)),
                pl.BlockSpec((1, td), lambda i: (0, i)),
                pl.BlockSpec((1, td), lambda i: (0, i)),
            ],
            out_specs=[
                pl.BlockSpec((n, td), lambda i: (0, i)),
                pl.BlockSpec((1, td), lambda i: (0, i)),
            ],
        ),
        compiler_params=pltpu.CompilerParams(
            dimension_semantics=("parallel",),            # independent feature tiles
            vmem_limit_bytes=vmem_limit,                  # generation-aware
        ),
    )(x, gamma, beta)

    log_det = jnp.sum(ld_feat, axis=1)                    # (1,)
    return log_det, u


def batchnorm_reference(x, gamma, beta):
    mu = jnp.mean(x, axis=0, keepdims=True)
    var = jnp.mean((x - mu) ** 2, axis=0, keepdims=True) + EPS
    x_hat = (x - mu) / jnp.sqrt(var)
    u = x_hat * jnp.exp(gamma) + beta
    log_det = jnp.sum(gamma - 0.5 * jnp.log(var + EPS), axis=1)
    return log_det, u


if __name__ == "__main__":
    key = jax.random.PRNGKey(0)

    # Small shape matching the module convention (batch, x_size).
    # Parameter init mirrors nn.Module __init__: beta = zeros, gamma = ones.
    N, D = 8, 32
    x = jax.random.normal(key, (N, D), dtype=jnp.float32)
    beta = jnp.zeros((1, D), dtype=jnp.float32)
    gamma = jnp.ones((1, D), dtype=jnp.float32)

    log_det, u = batchnorm_forward(x, gamma, beta)
    jax.block_until_ready((log_det, u))

    ld_ref, u_ref = batchnorm_reference(x, gamma, beta)
    assert u.shape == (N, D) and log_det.shape == (1,)
    assert jnp.allclose(u, u_ref, atol=1e-5, rtol=1e-5), "u mismatch (small)"
    assert jnp.allclose(log_det, ld_ref, atol=1e-5, rtol=1e-5), "log_det mismatch (small)"

    # Unaligned D > 128: exercises the ragged last block (no wrapper pad/slice)
    # and the in-kernel log-det lane masking.
    N1, D1 = 16, 300
    ka, kb, kc = jax.random.split(key, 3)
    x1 = jax.random.normal(ka, (N1, D1), dtype=jnp.float32) + 3.0   # nonzero mean
    gamma1 = 0.1 * jax.random.normal(kb, (1, D1), dtype=jnp.float32)
    beta1 = 0.1 * jax.random.normal(kc, (1, D1), dtype=jnp.float32)

    log_det1, u1 = batchnorm_forward(x1, gamma1, beta1)
    jax.block_until_ready((log_det1, u1))
    ld1_ref, u1_ref = batchnorm_reference(x1, gamma1, beta1)
    assert jnp.allclose(u1, u1_ref, atol=1e-5, rtol=1e-5), "u mismatch (unaligned)"
    assert jnp.allclose(log_det1, ld1_ref, atol=1e-4, rtol=1e-5), "log_det mismatch (unaligned)"

    # Larger aligned shape: exercises the multi-tile D grid (pipelined,
    # parallel axis, byte-budgeted tile width).
    N2, D2 = 128, 4096
    k1, k2, k3 = jax.random.split(jax.random.PRNGKey(1), 3)
    x2 = jax.random.normal(k1, (N2, D2), dtype=jnp.float32)
    gamma2 = 0.1 * jax.random.normal(k2, (1, D2), dtype=jnp.float32)
    beta2 = 0.1 * jax.random.normal(k3, (1, D2), dtype=jnp.float32)

    log_det2, u2 = batchnorm_forward(x2, gamma2, beta2)
    jax.block_until_ready((log_det2, u2))

    ld2_ref, u2_ref = batchnorm_reference(x2, gamma2, beta2)
    assert jnp.allclose(u2, u2_ref, atol=1e-4, rtol=1e-4), "u mismatch (large)"
    assert jnp.allclose(log_det2, ld2_ref, atol=1e-2, rtol=1e-4), "log_det mismatch (large)"

    print("KERNEL_OK")
</pallas_src>

<mosaic_0001>
module attributes {stable_mosaic.version = 11 : i64} {
  func.func @kernel(%arg0: i32, %arg1: memref<8x32xf32, #tpu.memory_space<vmem>>, %arg2: memref<1x32xf32, #tpu.memory_space<vmem>>, %arg3: memref<1x32xf32, #tpu.memory_space<vmem>>, %arg4: memref<8x32xf32, #tpu.memory_space<vmem>>, %arg5: memref<1x32xf32, #tpu.memory_space<vmem>>) attributes {dimension_semantics = [#tpu.dimension_semantics<parallel>], iteration_bounds = array<i64: 1>, scalar_prefetch = 0 : i64, scratch_operands = 0 : i64, tpu.core_type = #tpu.core_type<tc>, window_params = [{transform_indices = @transform_0, window_bounds = array<i64: 8, 32>}, {transform_indices = @transform_1, window_bounds = array<i64: 1, 32>}, {transform_indices = @transform_2, window_bounds = array<i64: 1, 32>}, {transform_indices = @transform_3, window_bounds = array<i64: 8, 32>}, {transform_indices = @transform_4, window_bounds = array<i64: 1, 32>}]} {
    %c0 = arith.constant 0 : index
    %c0_0 = arith.constant 0 : index
    %0 = vector.load %arg1[%c0, %c0_0] : memref<8x32xf32, #tpu.memory_space<vmem>>, vector<8x32xf32>
    %c0_1 = arith.constant 0 : index
    %c0_2 = arith.constant 0 : index
    %1 = vector.load %arg2[%c0_1, %c0_2] : memref<1x32xf32, #tpu.memory_space<vmem>>, vector<1x32xf32>
    %c0_3 = arith.constant 0 : index
    %c0_4 = arith.constant 0 : index
    %2 = vector.load %arg3[%c0_3, %c0_4] : memref<1x32xf32, #tpu.memory_space<vmem>>, vector<1x32xf32>
    %cst = arith.constant dense<0.000000e+00> : vector<32xf32>
    %3 = vector.multi_reduction <add>, %0, %cst [0] : vector<8x32xf32> to vector<32xf32>
    %4 = vector.shape_cast %3 : vector<32xf32> to vector<1x32xf32>
    %cst_5 = arith.constant 8.000000e+00 : f32
    %5 = vector.broadcast %cst_5 : f32 to vector<1x32xf32>
    %6 = arith.divf %4, %5 : vector<1x32xf32>
    %7 = vector.broadcast %6 : vector<1x32xf32> to vector<8x32xf32>
    %8 = arith.subf %0, %7 : vector<8x32xf32>
    %9 = arith.mulf %8, %8 : vector<8x32xf32>
    %cst_6 = arith.constant dense<0.000000e+00> : vector<32xf32>
    %10 = vector.multi_reduction <add>, %9, %cst_6 [0] : vector<8x32xf32> to vector<32xf32>
    %11 = vector.shape_cast %10 : vector<32xf32> to vector<1x32xf32>
    %cst_7 = arith.constant 8.000000e+00 : f32
    %12 = vector.broadcast %cst_7 : f32 to vector<1x32xf32>
    %13 = arith.divf %11, %12 : vector<1x32xf32>
    %cst_8 = arith.constant 9.99999997E-7 : f32
    %14 = vector.broadcast %cst_8 : f32 to vector<1x32xf32>
    %15 = arith.addf %13, %14 : vector<1x32xf32>
    %16 = math.rsqrt %15 : vector<1x32xf32>
    %17 = math.exp %1 : vector<1x32xf32>
    %18 = arith.mulf %16, %17 : vector<1x32xf32>
    %19 = vector.broadcast %18 : vector<1x32xf32> to vector<8x32xf32>
    %20 = arith.mulf %8, %19 : vector<8x32xf32>
    %21 = vector.broadcast %2 : vector<1x32xf32> to vector<8x32xf32>
    %22 = arith.addf %20, %21 : vector<8x32xf32>
    %c0_9 = arith.constant 0 : index
    %c0_10 = arith.constant 0 : index
    %23 = vector.load %arg4[%c0_9, %c0_10] : memref<8x32xf32, #tpu.memory_space<vmem>>, vector<8x32xf32>
    tpu.vector_store %arg4[%c0_9, %c0_10], %22 {strides = array<i32>} : memref<8x32xf32, #tpu.memory_space<vmem>>, vector<8x32xf32>,
    %cst_11 = arith.constant 9.99999997E-7 : f32
    %24 = vector.broadcast %cst_11 : f32 to vector<1x32xf32>
    %25 = arith.addf %15, %24 : vector<1x32xf32>
    %26 = math.log %25 : vector<1x32xf32>
    %cst_12 = arith.constant 5.000000e-01 : f32
    %27 = vector.broadcast %cst_12 : f32 to vector<1x32xf32>
    %28 = arith.mulf %27, %26 : vector<1x32xf32>
    %29 = arith.subf %1, %28 : vector<1x32xf32>
    %c32_i32 = arith.constant 32 : i32
    %30 = arith.muli %arg0, %c32_i32 : i32
    %31 = tpu.iota {dimensions = array<i32: 1>} : vector<1x32xi32>
    %32 = vector.broadcast %30 : i32 to vector<1x32xi32>
    %33 = arith.addi %32, %31 : vector<1x32xi32>
    %c32_i32_13 = arith.constant 32 : i32
    %34 = vector.broadcast %c32_i32_13 : i32 to vector<1x32xi32>
    %35 = arith.cmpi slt, %33, %34 : vector<1x32xi32>
    %cst_14 = arith.constant 0.000000e+00 : f32
    %36 = vector.broadcast %cst_14 : f32 to vector<1x32xf32>
    %37 = arith.select %35, %29, %36 : vector<1x32xi1>, vector<1x32xf32>
    %c0_15 = arith.constant 0 : index
    %c0_16 = arith.constant 0 : index
    %38 = vector.load %arg5[%c0_15, %c0_16] : memref<1x32xf32, #tpu.memory_space<vmem>>, vector<1x32xf32>
    tpu.vector_store %arg5[%c0_15, %c0_16], %37 {strides = array<i32>} : memref<1x32xf32, #tpu.memory_space<vmem>>, vector<1x32xf32>,
    return
  }
  func.func @transform_0(%arg0: i32) -> (i32, i32) {
    %c0_i32 = arith.constant 0 : i32
    %c0_i32_0 = arith.constant 0 : i32
    return %c0_i32, %arg0 : i32, i32
  }
  func.func @transform_1(%arg0: i32) -> (i32, i32) {
    %c0_i32 = arith.constant 0 : i32
    %c0_i32_0 = arith.constant 0 : i32
    return %c0_i32, %arg0 : i32, i32
  }
  func.func @transform_2(%arg0: i32) -> (i32, i32) {
    %c0_i32 = arith.constant 0 : i32
    %c0_i32_0 = arith.constant 0 : i32
    return %c0_i32, %arg0 : i32, i32
  }
  func.func @transform_3(%arg0: i32) -> (i32, i32) {
    %c0_i32 = arith.constant 0 : i32
    %c0_i32_0 = arith.constant 0 : i32
    return %c0_i32, %arg0 : i32, i32
  }
  func.func @transform_4(%arg0: i32) -> (i32, i32) {
    %c0_i32 = arith.constant 0 : i32
    %c0_i32_0 = arith.constant 0 : i32
    return %c0_i32, %arg0 : i32, i32
  }
}

</mosaic_0001>

<llo_original>
// kernel: batchnorm_forward.1
$region0: #{batchnorm_forward.1}
  #allocation0 [shape = 'u32[]', space=smem, size = 0x4, offset = 0x4, fixed_abs, tag = 'smem constant byte address 0x4 - core index']
  #allocation1 [shape = 'u32[144,128]{1,0:T(1,128)}', space=vmem, size = 0x12000, scoped, tag = 'internal scratch']
  %s0 = inlined_call_operand.hbm [shape: f32[8,32], index: 0, kind: input, shape index: {}]
  %s1 = inlined_call_operand.vmem [shape: f32[1,32], index: 1, kind: input, shape index: {}]
  %s2 = inlined_call_operand.vmem [shape: f32[1,32], index: 2, kind: input, shape index: {}]
  %s3 = inlined_call_operand.hbm [shape: f32[8,32], index: 3, kind: output, shape index: {0}]
  %s4 = inlined_call_operand.vmem [shape: f32[1,32], index: 4, kind: output, shape index: {1}]
  %5 = xla_tuple %s3, %s4
  %s6 = sld [smem:[#allocation0]]
  $region34: #{batchnorm_forward.1} parent=0
    _
  %s8 = ssub.s32 1, %s6
  %s9 = scalar_select 0, %s8, %s6
  $region1: #{batchnorm_forward.1} parent=0
    #allocation2 [shape = 'u8[4096]{0}', space=vmem, size = 0x1000, scoped, tag = 'input window, operand 0, single buffered']
    #allocation3 [shape = 's32[1]{0}', space=sflag, size = 0x4, scoped, tag = 'scoped memory for batchnorm_forward.1']
    #allocation4 [shape = 's32[1]{0}', space=sflag, size = 0x4, scoped, tag = 'scoped memory for batchnorm_forward.1']
    #allocation5 [shape = 'u8[4096]{0}', space=vmem, size = 0x1000, scoped, tag = 'output window, operand 0, single buffered']
    %10 = vsyncpa [#allocation3], 0
    %11 = vsyncpa [#allocation4], 0
    // Predicated region
    $region2: #{batchnorm_forward.1} parent=1 // pred_check
      _
    $region3: #{batchnorm_forward.1} parent=1 // pred_check_branch
      %13 = sbr.rel (0) target = $region5
    $region4: #{batchnorm_forward.1} parent=1 // pred_region
      %s15 = ssub.s32 128, 128
      %16 = vsyncadd [#allocation3], %s15
      %s18 = sshll.u32 [#allocation2], 4
      %s19 = int_to_ptr.vmem [resolvable:$true] %s18
      %21 = dma.hbm_to_vmem [thread:$0]  %s0, 128, %s19, [#allocation3]
    $region5: #{batchnorm_forward.1} parent=1 // pred_fallthru
      _
    // Predicated region
    $region6: #{batchnorm_forward.1} parent=1 // pred_check
      _
    $region7: #{batchnorm_forward.1} parent=1 // pred_check_branch
      %23 = sbr.rel (0) target = $region9
    $region8: #{batchnorm_forward.1} parent=1 // pred_region
      _
    $region9: #{batchnorm_forward.1} parent=1 // pred_fallthru
      _
    // Predicated region
    $region10: #{batchnorm_forward.1} parent=1 // pred_check
      _
    $region11: #{batchnorm_forward.1} parent=1 // pred_check_branch
      %25 = sbr.rel (0) target = $region13
    $region12: #{batchnorm_forward.1} parent=1 // pred_region
      _
    $region13: #{batchnorm_forward.1} parent=1 // pred_fallthru
      _
    // Predicated region
    $region14: #{batchnorm_forward.1} parent=1 // pred_check
      _
    $region15: #{batchnorm_forward.1} parent=1 // pred_check_branch
      %27 = sbr.rel (0) target = $region17
    $region16: #{batchnorm_forward.1} parent=1 // pred_region
      %28 = dma.done [#allocation3], 128
    $region17: #{batchnorm_forward.1} parent=1 // pred_fallthru
      _
    %v29 = vld [vmem:[#allocation2] sm:$0xff]
    %v30 = vld [vmem:[%s1] sm:$0x1]
    %v31 = vld [vmem:[%s2] sm:$0x1]
    %vm32 = vcmask 261120
    %v33 = vsel %vm32, %v29, 0.0
    %v34 = vrot.slane %v33, 4
    %v35 = vadd.f32 %v33, %v34
    %v36 = vrot.slane %v35, 2
    %v37 = vadd.f32 %v35, %v36
    %v38 = vrot.slane %v37, 1
    %v39 = vadd.f32 %v37, %v38
    %v40 = vrcp.pop 8.0
    %v41 = vmul.f32 %v39, %v40
    %v42 = vsub.f32 %v29, %v41
    %v43 = vmul.f32 %v42, %v42
    %v44 = vsel %vm32, %v43, 0.0
    %v45 = vrot.slane %v44, 4
    %v46 = vadd.f32 %v44, %v45
    %v47 = vrot.slane %v46, 2
    %v48 = vadd.f32 %v46, %v47
    %v49 = vrot.slane %v48, 1
    %v50 = vadd.f32 %v48, %v49
    %v51 = vmul.f32 %v50, %v40
    %v52 = vadd.f32 %v51, 1e-06
    %v53 = vrsqrt.pop %v52
    %v54 = vmul.f32 %v30, 1.442695
    %v55 = vpow.pop %v54
    %v56 = vmul.f32 %v53, %v55
    %v57 = vlaneseq
    %v58 = vshrl.u32 %v57, 7
    %v59 = vsub.s32 0, %v58
    %v60 = vrot.slane %v56, %v59
    %v61 = vmul.f32 %v42, %v60
    %v63 = vlaneseq
    %v64 = vshrl.u32 %v63, 7
    %v65 = vsub.s32 0, %v64
    %v66 = vrot.slane %v31, %v65
    %v68 = vadd.f32 %v61, %v66
    %69 = vst.msk [vmem:[#allocation5] sm:$0xff] %vm32, %v68
    %v70 = vadd.f32 %v52, 1e-06
    %v71 = vlog2.pop %v70
    %v72 = vmul.f32 %v71, 0.6931472
    %v73 = vmul.f32 %v72, 0.5
    %v74 = vsub.f32 %v30, %v73
    %s75 = smul.u32 0, 32
    %v76 = vlaneseq
    %v77 = vand.u32 %v76, 127
    %v78 = vstv %s75
    %v79 = vadd.s32 %v78, %v77
    %vm80 = vcmp.lt.s32.totalorder %v79, 32
    %v81 = vsel %vm80, %v74, 0.0
    %vm82 = vcmask 253952
    %83 = vst.msk [vmem:[%s4] sm:$0x1] %vm82, %v81
    // Predicated region
    $region18: #{batchnorm_forward.1} parent=1 // pred_check
      _
    $region19: #{batchnorm_forward.1} parent=1 // pred_check_branch
      %85 = sbr.rel (0) target = $region21
    $region20: #{batchnorm_forward.1} parent=1 // pred_region
      %s87 = ssub.s32 128, 128
      %88 = vsyncadd [#allocation4], %s87
      %s90 = sshll.u32 [#allocation5], 4
      %s91 = int_to_ptr.vmem [resolvable:$true] %s90
      %93 = dma.vmem_to_hbm [thread:$0]  %s91, 128, %s3, [#allocation4]
    $region21: #{batchnorm_forward.1} parent=1 // pred_fallthru
      _
    // Predicated region
    $region22: #{batchnorm_forward.1} parent=1 // pred_check
      _
    $region23: #{batchnorm_forward.1} parent=1 // pred_check_branch
      %95 = sbr.rel (0) target = $region25
    $region24: #{batchnorm_forward.1} parent=1 // pred_region
      _
    $region25: #{batchnorm_forward.1} parent=1 // pred_fallthru
      _
    // Predicated region
    $region26: #{batchnorm_forward.1} parent=1 // pred_check
      _
    $region27: #{batchnorm_forward.1} parent=1 // pred_check_branch
      %97 = sbr.rel (0) target = $region29
    $region28: #{batchnorm_forward.1} parent=1 // pred_region
      %98 = dma.done [#allocation4], 128
    $region29: #{batchnorm_forward.1} parent=1 // pred_fallthru
      _
    // Predicated region
    $region30: #{batchnorm_forward.1} parent=1 // pred_check
      _
    $region31: #{batchnorm_forward.1} parent=1 // pred_check_branch
      %100 = sbr.rel (0) target = $region33
    $region32: #{batchnorm_forward.1} parent=1 // pred_region
      _
    $region33: #{batchnorm_forward.1} parent=1 // pred_fallthru
      _
    %101 = vsyncpa [#allocation3], 1
    %102 = vsyncpa [#allocation4], 1

</llo_original>
